<compile_context>
chip_gen: v7x
topology: tpu7x:2x2x1
jax: 0.10.0
libtpu: 0.0.40
codegen_flags: <defaults>
</compile_context>

<pallas_src>
import jax
import jax.numpy as jnp
from jax.experimental import pallas as pl
from jax.experimental.pallas import tpu as pltpu

D_MODEL = 128   # hidden size fixed by the module (Linear(128, ...))
D_FF = 256      # GLU inner size fixed by the module (Linear(128, 256))


def mock_mlp_kernel(x_ref, wgu_ref, bgu_ref, wd_ref, bd_ref, o_ref):
    cdt = wgu_ref.dtype                       # bf16 (or f32 if full precision requested)
    x = x_ref[...].astype(cdt)

    # Fused gate|up projection: one [tm,128] @ [128,512] MXU pass, f32 accumulation.
    gu = jnp.dot(x, wgu_ref[...], preferred_element_type=jnp.float32) + bgu_ref[...]
    g = gu[:, :D_FF]                          # lane-aligned split (256 % 128 == 0)
    u = gu[:, D_FF:]
    h = (g * u).astype(cdt)                   # GLU product in f32, cast for the second matmul

    d = jnp.dot(h, wd_ref[...], preferred_element_type=jnp.float32) + bd_ref[...]
    o_ref[...] = d.astype(o_ref.dtype)


def fuse_mock_mlp_params(wg, bg, wu, bu, wd, bd, compute_dtype=jnp.bfloat16):
    """One-time parameter prep: fuse gate|up and cast weights to the MXU compute dtype.

    Weights are expected as [in, out]; biases as [1, out].  Biases stay f32 (added to the
    f32 accumulator).  Call this once at load time, not per forward call.
    """
    wgu = jnp.concatenate([wg, wu], axis=1).astype(compute_dtype)   # [128, 512]
    bgu = jnp.concatenate([bg, bu], axis=1).astype(jnp.float32)     # [1, 512]
    return wgu, bgu, wd.astype(compute_dtype), bd.astype(jnp.float32)


def _round_up(a, b):
    return ((a + b - 1) // b) * b


def _choose_tiling(m, max_tm=1024):
    """Pick (tm, steps) with tm a multiple of 8, tm <= ~max_tm, steps >= 2 when m >= 16
    (v7x 2-TC balance), preferring a split where tm*steps == round_up(m, 8) (zero padding)."""
    m8 = _round_up(max(m, 8), 8)
    max_steps = m8 // 8
    base = max(pl.cdiv(m8, max_tm), min(2, max_steps))
    base = min(base, max_steps)
    for steps in range(base, min(base + 8, max_steps) + 1):
        tm = _round_up(pl.cdiv(m8, steps), 8)
        if tm * steps == m8:                  # exact split -> no padding at all
            return tm, steps
    steps = base                              # fall back: minimal steps, padding < 8*steps rows
    return _round_up(pl.cdiv(m8, steps), 8), steps


def mock_mlp_forward(x, wgu, bgu, wd, bd, *, max_tm=1024):
    """x: [..., 128]; params are the outputs of fuse_mock_mlp_params()."""
    orig_shape = x.shape
    assert orig_shape[-1] == D_MODEL
    x2d = x.reshape(-1, D_MODEL)
    M = x2d.shape[0]

    tm, steps = _choose_tiling(M, max_tm)
    m_pad = tm * steps
    if m_pad != M:                            # rare; at most a few tens of rows
        x2d = jnp.pad(x2d, ((0, m_pad - M), (0, 0)))

    out2d = pl.pallas_call(
        mock_mlp_kernel,
        out_shape=jax.ShapeDtypeStruct((m_pad, D_MODEL), x.dtype),
        grid_spec=pltpu.PrefetchScalarGridSpec(
            num_scalar_prefetch=0,
            grid=(steps,),
            in_specs=[
                pl.BlockSpec((tm, D_MODEL), lambda i: (i, 0)),         # x tile
                pl.BlockSpec((D_MODEL, 2 * D_FF), lambda i: (0, 0)),   # fused gate|up weight
                pl.BlockSpec((1, 2 * D_FF), lambda i: (0, 0)),         # fused gate|up bias
                pl.BlockSpec((D_FF, D_MODEL), lambda i: (0, 0)),       # down_proj weight
                pl.BlockSpec((1, D_MODEL), lambda i: (0, 0)),          # down_proj bias
            ],
            out_specs=pl.BlockSpec((tm, D_MODEL), lambda i: (i, 0)),
        ),
        compiler_params=pltpu.CompilerParams(
            dimension_semantics=("parallel",),     # shard row tiles across v7x's 2 TCs
            vmem_limit_bytes=32 * 1024 * 1024,     # lets tm=1024 clear v5e's 16 MiB default
        ),
    )(x2d, wgu, bgu, wd, bd)

    if m_pad != M:
        out2d = out2d[:M]
    return out2d.reshape(orig_shape)


def _reference_f32(x2d, wg, bg, wu, bu, wd, bd):
    g = x2d @ wg + bg
    u = x2d @ wu + bu
    return (g * u) @ wd + bd


def _reference_bf16(x2d, wg, bg, wu, bu, wd, bd):
    """Same math as the kernel: bf16 MXU operands, f32 accumulation."""
    bf = jnp.bfloat16
    g = jnp.dot(x2d.astype(bf), wg.astype(bf), preferred_element_type=jnp.float32) + bg
    u = jnp.dot(x2d.astype(bf), wu.astype(bf), preferred_element_type=jnp.float32) + bu
    h = (g * u).astype(bf)
    return jnp.dot(h, wd.astype(bf), preferred_element_type=jnp.float32) + bd


if __name__ == "__main__":
    key = jax.random.PRNGKey(0)
    k_x, k_wg, k_bg, k_wu, k_bu, k_wd, k_bd = jax.random.split(key, 7)

    # Deterministic parameter init (nn.Linear-style uniform scaling), stored as [in, out].
    def init_linear(kw, kb, fan_in, fan_out):
        bound = 1.0 / (fan_in ** 0.5)
        w = jax.random.uniform(kw, (fan_in, fan_out), jnp.float32, -bound, bound)
        b = jax.random.uniform(kb, (1, fan_out), jnp.float32, -bound, bound)
        return w, b

    wg, bg = init_linear(k_wg, k_bg, D_MODEL, D_FF)    # gate_proj: 128 -> 256
    wu, bu = init_linear(k_wu, k_bu, D_MODEL, D_FF)    # up_proj:   128 -> 256
    wd, bd = init_linear(k_wd, k_bd, D_FF, D_MODEL)    # down_proj: 256 -> 128

    # One-time parameter fusion + bf16 cast (hoisted out of the per-call path).
    wgu, bgu, wd_c, bd_c = fuse_mock_mlp_params(wg, bg, wu, bu, wd, bd)

    # Small primary test: x = [2, 8, 128] -> M=16 -> two 8-row tiles (2-TC-balanced grid).
    B, S = 2, 8
    x = jax.random.normal(k_x, (B, S, D_MODEL), dtype=jnp.float32)

    out = jax.block_until_ready(mock_mlp_forward(x, wgu, bgu, wd_c, bd_c))
    assert out.shape == (B, S, D_MODEL)

    x2d = x.reshape(B * S, D_MODEL)
    ref_bf = _reference_bf16(x2d, wg, bg, wu, bu, wd, bd).reshape(B, S, D_MODEL)
    ref_f32 = _reference_f32(x2d, wg, bg, wu, bu, wd, bd).reshape(B, S, D_MODEL)
    # Kernel matches its own (bf16-operand, f32-accum) math tightly ...
    assert jnp.allclose(out, ref_bf, atol=2e-3, rtol=2e-3), "mismatch vs bf16-sim reference"
    # ... and the true f32 module within bf16 rounding error.
    assert jnp.allclose(out, ref_f32, atol=5e-2, rtol=5e-2), "mismatch vs f32 reference"

    # Second check: M = 600 -> adaptive tiling picks tm=200, 3 steps, ZERO padding.
    x_big = jax.random.normal(jax.random.PRNGKey(1), (3, 200, D_MODEL), dtype=jnp.float32)
    out_big = jax.block_until_ready(mock_mlp_forward(x_big, wgu, bgu, wd_c, bd_c))
    xb2d = x_big.reshape(-1, D_MODEL)
    refb_bf = _reference_bf16(xb2d, wg, bg, wu, bu, wd, bd).reshape(x_big.shape)
    refb_f32 = _reference_f32(xb2d, wg, bg, wu, bu, wd, bd).reshape(x_big.shape)
    assert jnp.allclose(out_big, refb_bf, atol=2e-3, rtol=2e-3), "mismatch vs bf16-sim (big)"
    assert jnp.allclose(out_big, refb_f32, atol=5e-2, rtol=5e-2), "mismatch vs f32 (big)"

    print("KERNEL_OK")
</pallas_src>

<mosaic_0001>
module attributes {stable_mosaic.version = 11 : i64} {
  func.func @mock_mlp_kernel(%arg0: i32, %arg1: memref<8x128xf32, #tpu.memory_space<vmem>>, %arg2: memref<128x512xbf16, #tpu.memory_space<vmem>>, %arg3: memref<1x512xf32, #tpu.memory_space<vmem>>, %arg4: memref<256x128xbf16, #tpu.memory_space<vmem>>, %arg5: memref<1x128xf32, #tpu.memory_space<vmem>>, %arg6: memref<8x128xf32, #tpu.memory_space<vmem>>) attributes {dimension_semantics = [#tpu.dimension_semantics<parallel>], iteration_bounds = array<i64: 2>, scalar_prefetch = 0 : i64, scratch_operands = 0 : i64, tpu.core_type = #tpu.core_type<tc>, window_params = [{transform_indices = @transform_0, window_bounds = array<i64: 8, 128>}, {pipeline_mode = #tpu.pipeline_mode<synchronous>, transform_indices = @transform_1, window_bounds = array<i64: 128, 512>}, {pipeline_mode = #tpu.pipeline_mode<synchronous>, transform_indices = @transform_2, window_bounds = array<i64: 1, 512>}, {pipeline_mode = #tpu.pipeline_mode<synchronous>, transform_indices = @transform_3, window_bounds = array<i64: 256, 128>}, {pipeline_mode = #tpu.pipeline_mode<synchronous>, transform_indices = @transform_4, window_bounds = array<i64: 1, 128>}, {transform_indices = @transform_5, window_bounds = array<i64: 8, 128>}]} {
    %c0 = arith.constant 0 : index
    %c0_0 = arith.constant 0 : index
    %0 = vector.load %arg1[%c0, %c0_0] : memref<8x128xf32, #tpu.memory_space<vmem>>, vector<8x128xf32>
    %1 = arith.truncf %0 : vector<8x128xf32> to vector<8x128xbf16>
    %c0_1 = arith.constant 0 : index
    %c0_2 = arith.constant 0 : index
    %2 = vector.load %arg2[%c0_1, %c0_2] : memref<128x512xbf16, #tpu.memory_space<vmem>>, vector<128x512xbf16>
    %cst = arith.constant dense<0.000000e+00> : vector<8x512xf32>
    %3 = tpu.matmul %1, %2, %cst {dimension_numbers = #tpu.dot_dimension_numbers<[1], [0], [0], [1], [0, 0, 1, 1], [], []>} : vector<8x128xbf16>, vector<128x512xbf16>, vector<8x512xf32> -> vector<8x512xf32>
    %c0_3 = arith.constant 0 : index
    %c0_4 = arith.constant 0 : index
    %4 = vector.load %arg3[%c0_3, %c0_4] : memref<1x512xf32, #tpu.memory_space<vmem>>, vector<1x512xf32>
    %5 = vector.broadcast %4 : vector<1x512xf32> to vector<8x512xf32>
    %6 = arith.addf %3, %5 : vector<8x512xf32>
    %7 = vector.extract_strided_slice %6 {offsets = [0, 0], sizes = [8, 256], strides = [1, 1]} : vector<8x512xf32> to vector<8x256xf32>
    %8 = vector.extract_strided_slice %6 {offsets = [0, 256], sizes = [8, 256], strides = [1, 1]} : vector<8x512xf32> to vector<8x256xf32>
    %9 = arith.mulf %7, %8 : vector<8x256xf32>
    %10 = arith.truncf %9 : vector<8x256xf32> to vector<8x256xbf16>
    %c0_5 = arith.constant 0 : index
    %c0_6 = arith.constant 0 : index
    %11 = vector.load %arg4[%c0_5, %c0_6] : memref<256x128xbf16, #tpu.memory_space<vmem>>, vector<256x128xbf16>
    %cst_7 = arith.constant dense<0.000000e+00> : vector<8x128xf32>
    %12 = tpu.matmul %10, %11, %cst_7 {dimension_numbers = #tpu.dot_dimension_numbers<[1], [0], [0], [1], [0, 0, 1, 1], [], []>} : vector<8x256xbf16>, vector<256x128xbf16>, vector<8x128xf32> -> vector<8x128xf32>
    %c0_8 = arith.constant 0 : index
    %c0_9 = arith.constant 0 : index
    %13 = vector.load %arg5[%c0_8, %c0_9] : memref<1x128xf32, #tpu.memory_space<vmem>>, vector<1x128xf32>
    %14 = vector.broadcast %13 : vector<1x128xf32> to vector<8x128xf32>
    %15 = arith.addf %12, %14 : vector<8x128xf32>
    %c0_10 = arith.constant 0 : index
    %c0_11 = arith.constant 0 : index
    %16 = vector.load %arg6[%c0_10, %c0_11] : memref<8x128xf32, #tpu.memory_space<vmem>>, vector<8x128xf32>
    tpu.vector_store %arg6[%c0_10, %c0_11], %15 {strides = array<i32>} : memref<8x128xf32, #tpu.memory_space<vmem>>, vector<8x128xf32>,
    return
  }
  func.func @transform_0(%arg0: i32) -> (i32, i32) {
    %c0_i32 = arith.constant 0 : i32
    %c0_i32_0 = arith.constant 0 : i32
    return %arg0, %c0_i32 : i32, i32
  }
  func.func @transform_1(%arg0: i32) -> (i32, i32) {
    %c0_i32 = arith.constant 0 : i32
    %c0_i32_0 = arith.constant 0 : i32
    %c0_i32_1 = arith.constant 0 : i32
    return %c0_i32, %c0_i32_0 : i32, i32
  }
  func.func @transform_2(%arg0: i32) -> (i32, i32) {
    %c0_i32 = arith.constant 0 : i32
    %c0_i32_0 = arith.constant 0 : i32
    %c0_i32_1 = arith.constant 0 : i32
    return %c0_i32, %c0_i32_0 : i32, i32
  }
  func.func @transform_3(%arg0: i32) -> (i32, i32) {
    %c0_i32 = arith.constant 0 : i32
    %c0_i32_0 = arith.constant 0 : i32
    %c0_i32_1 = arith.constant 0 : i32
    return %c0_i32, %c0_i32_0 : i32, i32
  }
  func.func @transform_4(%arg0: i32) -> (i32, i32) {
    %c0_i32 = arith.constant 0 : i32
    %c0_i32_0 = arith.constant 0 : i32
    %c0_i32_1 = arith.constant 0 : i32
    return %c0_i32, %c0_i32_0 : i32, i32
  }
  func.func @transform_5(%arg0: i32) -> (i32, i32) {
    %c0_i32 = arith.constant 0 : i32
    %c0_i32_0 = arith.constant 0 : i32
    return %arg0, %c0_i32 : i32, i32
  }
}

</mosaic_0001>

<llo_original>
// kernel: tpu_custom_call.1
$region0: #{tpu_custom_call.1}
  #allocation0 [shape = 'u32[]', space=smem, size = 0x4, offset = 0x4, fixed_abs, tag = 'smem constant byte address 0x4 - core index']
  #allocation1 [shape = 'u32[144,128]{1,0:T(1,128)}', space=vmem, size = 0x12000, scoped, tag = 'internal scratch']
  %s0 = inlined_call_operand.hbm [shape: f32[16,128], index: 0, kind: input, shape index: {}]
  %s1 = inlined_call_operand.hbm [shape: bf16[128,512], index: 1, kind: input, shape index: {}]
  %s2 = inlined_call_operand.vmem [shape: f32[1,512], index: 2, kind: input, shape index: {}]
  %s3 = inlined_call_operand.hbm [shape: bf16[256,128], index: 3, kind: input, shape index: {}]
  %s4 = inlined_call_operand.vmem [shape: f32[1,128], index: 4, kind: input, shape index: {}]
  %s5 = inlined_call_operand.hbm [shape: f32[16,128], index: 5, kind: output, shape index: {}]
  %s6 = sld [smem:[#allocation0]]
  $region65: #{tpu_custom_call.1} parent=0
    _
  %s8 = ssub.s32 1, %s6
  %s9 = scalar_select 0, %s8, %s6
  $region1: #{tpu_custom_call.1} parent=0
    #allocation2 [shape = 'u8[8192]{0}', space=vmem, size = 0x2000, scoped, tag = 'input window, operand 0']
    #allocation3 [shape = 's32[2]{0}', space=sflag, size = 0x8, scoped, tag = 'scoped memory for tpu_custom_call.1']
    #allocation4 [shape = 's32[2]{0}', space=sflag, size = 0x8, scoped, tag = 'scoped memory for tpu_custom_call.1']
    #allocation5 [shape = 'u8[131072]{0}', space=vmem, size = 0x20000, scoped, tag = 'input window, operand 1, single buffered']
    #allocation6 [shape = 's32[1]{0}', space=sflag, size = 0x4, scoped, tag = 'scoped memory for tpu_custom_call.1']
    #allocation7 [shape = 'u8[65536]{0}', space=vmem, size = 0x10000, scoped, tag = 'input window, operand 3, single buffered']
    #allocation8 [shape = 'u8[8192]{0}', space=vmem, size = 0x2000, scoped, tag = 'output window, operand 0']
    %10 = vsyncpa [#allocation3], 0
    %s11 = scalar_lea.sflag [#allocation3], 1
    %12 = vsyncpa %s11, 0
    %13 = vsyncpa [#allocation6], 0
    %14 = vsyncpa [#allocation4], 0
    %s15 = scalar_lea.sflag [#allocation4], 1
    %16 = vsyncpa %s15, 0
    loop: start=0, step=1, limit=4
    $region2: #{tpu_custom_call.1} parent=1 // loop_pre_header
      _
    $region3: #{tpu_custom_call.1} parent=1 // loop_header
      %s18 = sphi 0, %s22
      %p19 = scmp.ge.s32.totalorder %s18, 4
      %s28 = sphi 0, %s30
      %s31 = sphi 0, %s28
      %s32 = sphi 0, %s31
      %s48 = sphi 0, %s32
      %s52 = sphi 0, %s52
      %s54 = sphi 0, %s52
      %s55 = sphi 0, %s54
      %s69 = sphi 0, %s55
      %s73 = sphi 0, %s73
      %s75 = sphi 0, %s73
      %s76 = sphi 0, %s75
      %s90 = sphi 0, %s76
      %s94 = sphi 0, %s94
      %s96 = sphi 0, %s94
      %s97 = sphi 0, %s96
      %s111 = sphi 0, %s97
      %s115 = sphi 0, %s115
      %s117 = sphi 0, %s115
      %s118 = sphi 0, %s117
      %s132 = sphi 0, %s118
      %s138 = sphi 0, %s140
      %s141 = sphi 0, %s138
      %s142 = sphi 0, %s141
      %s158 = sphi 0, %s142
    $region4: #{tpu_custom_call.1} parent=1 // loop_header_branch
      %21 = sbr.rel (%p19) target = $region8
    $region5: #{tpu_custom_call.1} parent=1 // loop_body
      %s23 = ssub.s32 %s18, 1
      %s24 = ssub.s32 %s18, 2
      %s25 = sadd.s32 %s18, 1
      %s26 = ssub.s32 %s18, %s25
      %p27 = scmp.eq.s32.totalorder %s26, 0
      %s29 = sadd.s32 %s28, 1
      %s30 = scalar_select %p27, %s28, %s29
      %p33 = pneg %p27
      %p34 = scmp.eq.s32.totalorder %s18, 1
      %p35 = por %p33, %p34
      %p36 = scmp.ne.s32.totalorder %s28, %s31
      %p37 = scmp.eq.s32.totalorder %s18, 0
      %p38 = por %p36, %p37
      %p39 = scmp.ne.s32.totalorder %s28, %s31
      %p40 = scmp.eq.s32.totalorder %s23, 1
      %p41 = por %p39, %p40
      %p42 = scmp.ne.s32.totalorder %s31, %s32
      %p43 = scmp.eq.s32.totalorder %s23, 0
      %p44 = por %p42, %p43
      %p45 = scmp.ne.s32.totalorder %s31, %s32
      %p46 = scmp.eq.s32.totalorder %s24, 1
      %p47 = por %p45, %p46
      %p49 = scmp.ne.s32.totalorder %s32, %s48
      %p50 = scmp.eq.s32.totalorder %s24, 0
      %p51 = por %p49, %p50
      %s53 = sadd.s32 %s52, 1
      %p56 = scmp.eq.s32.totalorder %s18, 1
      %p57 = scmp.ne.s32.totalorder %s52, %s54
      %p58 = scmp.eq.s32.totalorder %s18, 0
      %p59 = por %p57, %p58
      %p60 = scmp.ne.s32.totalorder %s52, %s54
      %p61 = scmp.eq.s32.totalorder %s23, 1
      %p62 = por %p60, %p61
      %p63 = scmp.ne.s32.totalorder %s54, %s55
      %p64 = scmp.eq.s32.totalorder %s23, 0
      %p65 = por %p63, %p64
      %p66 = scmp.ne.s32.totalorder %s54, %s55
      %p67 = scmp.eq.s32.totalorder %s24, 1
      %p68 = por %p66, %p67
      %p70 = scmp.ne.s32.totalorder %s55, %s69
      %p71 = scmp.eq.s32.totalorder %s24, 0
      %p72 = por %p70, %p71
      %s74 = sadd.s32 %s73, 1
      %p77 = scmp.eq.s32.totalorder %s18, 1
      %p78 = scmp.ne.s32.totalorder %s73, %s75
      %p79 = scmp.eq.s32.totalorder %s18, 0
      %p80 = por %p78, %p79
      %p81 = scmp.ne.s32.totalorder %s73, %s75
      %p82 = scmp.eq.s32.totalorder %s23, 1
      %p83 = por %p81, %p82
      %p84 = scmp.ne.s32.totalorder %s75, %s76
      %p85 = scmp.eq.s32.totalorder %s23, 0
      %p86 = por %p84, %p85
      %p87 = scmp.ne.s32.totalorder %s75, %s76
      %p88 = scmp.eq.s32.totalorder %s24, 1
      %p89 = por %p87, %p88
      %p91 = scmp.ne.s32.totalorder %s76, %s90
      %p92 = scmp.eq.s32.totalorder %s24, 0
      %p93 = por %p91, %p92
      %s95 = sadd.s32 %s94, 1
      %p98 = scmp.eq.s32.totalorder %s18, 1
      %p99 = scmp.ne.s32.totalorder %s94, %s96
      %p100 = scmp.eq.s32.totalorder %s18, 0
      %p101 = por %p99, %p100
      %p102 = scmp.ne.s32.totalorder %s94, %s96
      %p103 = scmp.eq.s32.totalorder %s23, 1
      %p104 = por %p102, %p103
      %p105 = scmp.ne.s32.totalorder %s96, %s97
      %p106 = scmp.eq.s32.totalorder %s23, 0
      %p107 = por %p105, %p106
      %p108 = scmp.ne.s32.totalorder %s96, %s97
      %p109 = scmp.eq.s32.totalorder %s24, 1
      %p110 = por %p108, %p109
      %p112 = scmp.ne.s32.totalorder %s97, %s111
      %p113 = scmp.eq.s32.totalorder %s24, 0
      %p114 = por %p112, %p113
      %s116 = sadd.s32 %s115, 1
      %p119 = scmp.eq.s32.totalorder %s18, 1
      %p120 = scmp.ne.s32.totalorder %s115, %s117
      %p121 = scmp.eq.s32.totalorder %s18, 0
      %p122 = por %p120, %p121
      %p123 = scmp.ne.s32.totalorder %s115, %s117
      %p124 = scmp.eq.s32.totalorder %s23, 1
      %p125 = por %p123, %p124
      %p126 = scmp.ne.s32.totalorder %s117, %s118
      %p127 = scmp.eq.s32.totalorder %s23, 0
      %p128 = por %p126, %p127
      %p129 = scmp.ne.s32.totalorder %s117, %s118
      %p130 = scmp.eq.s32.totalorder %s24, 1
      %p131 = por %p129, %p130
      %p133 = scmp.ne.s32.totalorder %s118, %s132
      %p134 = scmp.eq.s32.totalorder %s24, 0
      %p135 = por %p133, %p134
      %s136 = ssub.s32 %s18, %s25
      %p137 = scmp.eq.s32.totalorder %s136, 0
      %s139 = sadd.s32 %s138, 1
      %s140 = scalar_select %p137, %s138, %s139
      %p143 = pneg %p137
      %p144 = scmp.eq.s32.totalorder %s18, 1
      %p145 = por %p143, %p144
      %p146 = scmp.ne.s32.totalorder %s138, %s141
      %p147 = scmp.eq.s32.totalorder %s18, 0
      %p148 = por %p146, %p147
      %p149 = scmp.ne.s32.totalorder %s138, %s141
      %p150 = scmp.eq.s32.totalorder %s23, 1
      %p151 = por %p149, %p150
      %p152 = scmp.ne.s32.totalorder %s141, %s142
      %p153 = scmp.eq.s32.totalorder %s23, 0
      %p154 = por %p152, %p153
      %p155 = scmp.ne.s32.totalorder %s141, %s142
      %p156 = scmp.eq.s32.totalorder %s24, 1
      %p157 = por %p155, %p156
      %p159 = scmp.ne.s32.totalorder %s142, %s158
      %p160 = scmp.eq.s32.totalorder %s24, 0
      %p161 = por %p159, %p160
      %p162 = scmp.le.s32.totalorder 1, %s18
      %p163 = scmp.lt.s32.totalorder %s18, 3
      %p164 = pnand %p162, %p163
      %p165 = pneg %p164
      // Predicated region
      $region9: #{tpu_custom_call.1} parent=5 // pred_check
        _
      $region10: #{tpu_custom_call.1} parent=5 // pred_check_branch
        %167 = sbr.rel (%p164) target = $region12
      $region11: #{tpu_custom_call.1} parent=5 // pred_region
        %s168 = ssub.s32 %s18, 1
        // Predicated region
        $region13: #{tpu_custom_call.1} parent=11 // pred_check
          %p169 = pneg %p65
        $region14: #{tpu_custom_call.1} parent=11 // pred_check_branch
          %171 = sbr.rel (%p169) target = $region16
        $region15: #{tpu_custom_call.1} parent=11 // pred_region
          %s173 = ssub.s32 4096, 4096
          %174 = vsyncadd [#allocation6], %s173
          %s175 = sshll.u32 [#allocation5], 4
          %s176 = int_to_ptr.vmem [resolvable:$true] %s175
          %181 = dma.hbm_to_vmem [thread:$0]  %s1, 4096, %s176, [#allocation6], 256, 256, 16
        $region16: #{tpu_custom_call.1} parent=11 // pred_fallthru
          _
        // Predicated region
        $region17: #{tpu_custom_call.1} parent=11 // pred_check
          %p182 = pneg %p86
        $region18: #{tpu_custom_call.1} parent=11 // pred_check_branch
          %184 = sbr.rel (%p182) target = $region20
        $region19: #{tpu_custom_call.1} parent=11 // pred_region
          _
        $region20: #{tpu_custom_call.1} parent=11 // pred_fallthru
          _
        // Predicated region
        $region21: #{tpu_custom_call.1} parent=11 // pred_check
          %p185 = pneg %p107
        $region22: #{tpu_custom_call.1} parent=11 // pred_check_branch
          %187 = sbr.rel (%p185) target = $region24
        $region23: #{tpu_custom_call.1} parent=11 // pred_region
          %s189 = ssub.s32 2048, 2048
          %190 = vsyncadd [#allocation6], %s189
          %s191 = sshll.u32 [#allocation7], 4
          %s192 = int_to_ptr.vmem [resolvable:$true] %s191
          %197 = dma.hbm_to_vmem [thread:$0]  %s3, 2048, %s192, [#allocation6], 64, 64, 4
        $region24: #{tpu_custom_call.1} parent=11 // pred_fallthru
          _
        // Predicated region
        $region25: #{tpu_custom_call.1} parent=11 // pred_check
          %p198 = pneg %p128
        $region26: #{tpu_custom_call.1} parent=11 // pred_check_branch
          %200 = sbr.rel (%p198) target = $region28
        $region27: #{tpu_custom_call.1} parent=11 // pred_region
          _
        $region28: #{tpu_custom_call.1} parent=11 // pred_fallthru
          _
      $region12: #{tpu_custom_call.1} parent=5 // pred_fallthru
        _
      %p201 = scmp.lt.s32.totalorder %s18, 2
      // Predicated region
      $region29: #{tpu_custom_call.1} parent=5 // pred_check
        %p202 = pneg %p201
      $region30: #{tpu_custom_call.1} parent=5 // pred_check_branch
        %204 = sbr.rel (%p202) target = $region32
      $region31: #{tpu_custom_call.1} parent=5 // pred_region
        // Predicated region
        $region33: #{tpu_custom_call.1} parent=31 // pred_check
          %p205 = pneg %p38
        $region34: #{tpu_custom_call.1} parent=31 // pred_check_branch
          %207 = sbr.rel (%p205) target = $region36
        $region35: #{tpu_custom_call.1} parent=31 // pred_region
          %s208 = sand.u32 %s28, 1
          %s209 = scalar_lea.sflag [#allocation3], %s208
          %s210 = sand.u32 %s28, 1
          %s211 = smul.addr %s210, 8
          %s212 = scalar_lea.vmem [#allocation2], %s211
          %s214 = ssub.s32 128, 128
          %215 = vsyncadd %s209, %s214
          %s216 = smul.addr %s18, 128
          %s217 = scalar_lea.hbm %s0, %s216
          %s219 = sshll.u32 %s212, 4
          %s220 = int_to_ptr.vmem [resolvable:$true] %s219
          %222 = dma.hbm_to_vmem [thread:$0]  %s217, 128, %s220, %s209
        $region36: #{tpu_custom_call.1} parent=31 // pred_fallthru
          _
      $region32: #{tpu_custom_call.1} parent=5 // pred_fallthru
        _
      %p223 = scmp.le.s32.totalorder 1, %s18
      %p224 = scmp.lt.s32.totalorder %s18, 3
      %p225 = pnand %p223, %p224
      %p226 = pneg %p225
      // Predicated region
      $region37: #{tpu_custom_call.1} parent=5 // pred_check
        _
      $region38: #{tpu_custom_call.1} parent=5 // pred_check_branch
        %228 = sbr.rel (%p225) target = $region40
      $region39: #{tpu_custom_call.1} parent=5 // pred_region
        %s229 = ssub.s32 %s18, 1
        %s230 = sand.u32 %s31, 1
        %s231 = scalar_lea.sflag [#allocation3], %s230
        %s232 = sand.u32 %s31, 1
        %s233 = smul.addr %s232, 8
        %s234 = scalar_lea.vmem [#allocation2], %s233
        // Predicated region
        $region41: #{tpu_custom_call.1} parent=39 // pred_check
          %p235 = pneg %p44
        $region42: #{tpu_custom_call.1} parent=39 // pred_check_branch
          %237 = sbr.rel (%p235) target = $region44
        $region43: #{tpu_custom_call.1} parent=39 // pred_region
          %238 = dma.done %s231, 128
        $region44: #{tpu_custom_call.1} parent=39 // pred_fallthru
          _
        // Predicated region
        $region45: #{tpu_custom_call.1} parent=39 // pred_check
          %p239 = pneg %p65
        $region46: #{tpu_custom_call.1} parent=39 // pred_check_branch
          %241 = sbr.rel (%p239) target = $region48
        $region47: #{tpu_custom_call.1} parent=39 // pred_region
          %242 = dma.done [#allocation6], 4096
        $region48: #{tpu_custom_call.1} parent=39 // pred_fallthru
          _
        // Predicated region
        $region49: #{tpu_custom_call.1} parent=39 // pred_check
          %p243 = pneg %p107
        $region50: #{tpu_custom_call.1} parent=39 // pred_check_branch
          %245 = sbr.rel (%p243) target = $region52
        $region51: #{tpu_custom_call.1} parent=39 // pred_region
          %246 = dma.done [#allocation6], 2048
        $region52: #{tpu_custom_call.1} parent=39 // pred_fallthru
          _
        %s247 = sand.u32 %s31, 1
        %s248 = scalar_lea.sflag [#allocation3], %s247
        %s249 = sand.u32 %s31, 1
        %s250 = smul.addr %s249, 8
        %s251 = scalar_lea.vmem [#allocation2], %s250
        %p252 = pneg %p44
        %p253 = pneg %p41
        %p254 = pneg %p65
        %p255 = pneg %p62
        %p256 = pneg %p86
        %p257 = pneg %p83
        %p258 = pneg %p107
        %p259 = pneg %p104
        %p260 = pneg %p128
        %p261 = pneg %p125
        %p262 = pneg %p154
        %p263 = pneg %p151
        %s264 = sand.u32 %s141, 1
        %s265 = scalar_lea.sflag [#allocation4], %s264
        %s266 = sand.u32 %s141, 1
        %s267 = smul.addr %s266, 8
        %s268 = scalar_lea.vmem [#allocation8], %s267
        %v270 = vld [vmem:[%s234] sm:$0xff]
        %v271 = vpack.c.bf16 %v270, %v270
        %v272 = vld [vmem:[#allocation5] sm:$0xff]
        %v273 = vld [vmem:[#allocation5 + $0x8] sm:$0xff]
        %v274 = vld [vmem:[#allocation5 + $0x10] sm:$0xff]
        %v275 = vld [vmem:[#allocation5 + $0x18] sm:$0xff]
        %v276 = vld [vmem:[#allocation5 + $0x20] sm:$0xff]
        %v277 = vld [vmem:[#allocation5 + $0x28] sm:$0xff]
        %v278 = vld [vmem:[#allocation5 + $0x30] sm:$0xff]
        %v279 = vld [vmem:[#allocation5 + $0x38] sm:$0xff]
        %v280 = vld [vmem:[#allocation5 + $0x40] sm:$0xff]
        %v281 = vld [vmem:[#allocation5 + $0x48] sm:$0xff]
        %v282 = vld [vmem:[#allocation5 + $0x50] sm:$0xff]
        %v283 = vld [vmem:[#allocation5 + $0x58] sm:$0xff]
        %v284 = vld [vmem:[#allocation5 + $0x60] sm:$0xff]
        %v285 = vld [vmem:[#allocation5 + $0x68] sm:$0xff]
        %v286 = vld [vmem:[#allocation5 + $0x70] sm:$0xff]
        %v287 = vld [vmem:[#allocation5 + $0x78] sm:$0xff]
        %v288 = vld [vmem:[#allocation5 + $0x80] sm:$0xff]
        %v289 = vld [vmem:[#allocation5 + $0x88] sm:$0xff]
        %v290 = vld [vmem:[#allocation5 + $0x90] sm:$0xff]
        %v291 = vld [vmem:[#allocation5 + $0x98] sm:$0xff]
        %v292 = vld [vmem:[#allocation5 + $0xa0] sm:$0xff]
        %v293 = vld [vmem:[#allocation5 + $0xa8] sm:$0xff]
        %v294 = vld [vmem:[#allocation5 + $0xb0] sm:$0xff]
        %v295 = vld [vmem:[#allocation5 + $0xb8] sm:$0xff]
        %v296 = vld [vmem:[#allocation5 + $0xc0] sm:$0xff]
        %v297 = vld [vmem:[#allocation5 + $0xc8] sm:$0xff]
        %v298 = vld [vmem:[#allocation5 + $0xd0] sm:$0xff]
        %v299 = vld [vmem:[#allocation5 + $0xd8] sm:$0xff]
        %v300 = vld [vmem:[#allocation5 + $0xe0] sm:$0xff]
        %v301 = vld [vmem:[#allocation5 + $0xe8] sm:$0xff]
        %v302 = vld [vmem:[#allocation5 + $0xf0] sm:$0xff]
        %v303 = vld [vmem:[#allocation5 + $0xf8] sm:$0xff]
        %v304 = vld [vmem:[%s2] sm:$0xf]
        %v306 = vlaneseq
        %v307 = vshrl.u32 %v306, 7
        %v308 = vsub.s32 0, %v307
        %v309 = vrot.slane %v304, %v308
        %v310 = vlaneseq
        %v311 = vshrl.u32 %v310, 7
        %v312 = vsub.s32 1, %v311
        %v313 = vrot.slane %v304, %v312
        %v314 = vlaneseq
        %v315 = vshrl.u32 %v314, 7
        %v316 = vsub.s32 2, %v315
        %v317 = vrot.slane %v304, %v316
        %v318 = vlaneseq
        %v319 = vshrl.u32 %v318, 7
        %v320 = vsub.s32 3, %v319
        %v321 = vrot.slane %v304, %v320
        %v358 = vunpack.c.l.b16 %v272
        %v359 = vunpack.c.h.b16 %v272
        %v360 = vunpack.c.l.b16 %v273
        %v361 = vunpack.c.h.b16 %v273
        %v362 = vunpack.c.l.b16 %v274
        %v363 = vunpack.c.h.b16 %v274
        %v364 = vunpack.c.l.b16 %v275
        %v365 = vunpack.c.h.b16 %v275
        %v366 = vunpack.c.l.b16 %v276
        %v367 = vunpack.c.h.b16 %v276
        %v368 = vunpack.c.l.b16 %v277
        %v369 = vunpack.c.h.b16 %v277
        %v370 = vunpack.c.l.b16 %v278
        %v371 = vunpack.c.h.b16 %v278
        %v372 = vunpack.c.l.b16 %v279
        %v373 = vunpack.c.h.b16 %v279
        %v374 = vunpack.c.l.b16 %v280
        %v375 = vunpack.c.h.b16 %v280
        %v376 = vunpack.c.l.b16 %v281
        %v377 = vunpack.c.h.b16 %v281
        %v378 = vunpack.c.l.b16 %v282
        %v379 = vunpack.c.h.b16 %v282
        %v380 = vunpack.c.l.b16 %v283
        %v381 = vunpack.c.h.b16 %v283
        %v382 = vunpack.c.l.b16 %v284
        %v383 = vunpack.c.h.b16 %v284
        %v384 = vunpack.c.l.b16 %v285
        %v385 = vunpack.c.h.b16 %v285
        %v386 = vunpack.c.l.b16 %v286
        %v387 = vunpack.c.h.b16 %v286
        %v388 = vunpack.c.l.b16 %v287
        %v389 = vunpack.c.h.b16 %v287
        %v390 = vunpack.c.l.b16 %v288
        %v391 = vunpack.c.h.b16 %v288
        %v392 = vunpack.c.l.b16 %v289
        %v393 = vunpack.c.h.b16 %v289
        %v394 = vunpack.c.l.b16 %v290
        %v395 = vunpack.c.h.b16 %v290
        %v396 = vunpack.c.l.b16 %v291
        %v397 = vunpack.c.h.b16 %v291
        %v398 = vunpack.c.l.b16 %v292
        %v399 = vunpack.c.h.b16 %v292
        %v400 = vunpack.c.l.b16 %v293
        %v401 = vunpack.c.h.b16 %v293
        %v402 = vunpack.c.l.b16 %v294
        %v403 = vunpack.c.h.b16 %v294
        %v404 = vunpack.c.l.b16 %v295
        %v405 = vunpack.c.h.b16 %v295
        %v406 = vunpack.c.l.b16 %v296
        %v407 = vunpack.c.h.b16 %v296
        %v408 = vunpack.c.l.b16 %v297
        %v409 = vunpack.c.h.b16 %v297
        %v410 = vunpack.c.l.b16 %v298
        %v411 = vunpack.c.h.b16 %v298
        %v412 = vunpack.c.l.b16 %v299
        %v413 = vunpack.c.h.b16 %v299
        %v414 = vunpack.c.l.b16 %v300
        %v415 = vunpack.c.h.b16 %v300
        %v416 = vunpack.c.l.b16 %v301
        %v417 = vunpack.c.h.b16 %v301
        %v418 = vunpack.c.l.b16 %v302
        %v419 = vunpack.c.h.b16 %v302
        %v420 = vunpack.c.l.b16 %v303
        %v421 = vunpack.c.h.b16 %v303
        %v422 = vpack.c.b16 %v362, %v358
        %v423 = vpack.c.b16 %v363, %v359
        %v424 = vpack.c.b16 %v364, %v360
        %v425 = vpack.c.b16 %v365, %v361
        %v426 = vpack.c.b16 %v370, %v366
        %v427 = vpack.c.b16 %v371, %v367
        %v428 = vpack.c.b16 %v372, %v368
        %v429 = vpack.c.b16 %v373, %v369
        %v430 = vpack.c.b16 %v378, %v374
        %v431 = vpack.c.b16 %v379, %v375
        %v432 = vpack.c.b16 %v380, %v376
        %v433 = vpack.c.b16 %v381, %v377
        %v434 = vpack.c.b16 %v386, %v382
        %v435 = vpack.c.b16 %v387, %v383
        %v436 = vpack.c.b16 %v388, %v384
        %v437 = vpack.c.b16 %v389, %v385
        %v438 = vpack.c.b16 %v394, %v390
        %v439 = vpack.c.b16 %v395, %v391
        %v440 = vpack.c.b16 %v396, %v392
        %v441 = vpack.c.b16 %v397, %v393
        %v442 = vpack.c.b16 %v402, %v398
        %v443 = vpack.c.b16 %v403, %v399
        %v444 = vpack.c.b16 %v404, %v400
        %v445 = vpack.c.b16 %v405, %v401
        %v446 = vpack.c.b16 %v410, %v406
        %v447 = vpack.c.b16 %v411, %v407
        %v448 = vpack.c.b16 %v412, %v408
        %v449 = vpack.c.b16 %v413, %v409
        %v450 = vpack.c.b16 %v418, %v414
        %v451 = vpack.c.b16 %v419, %v415
        %v452 = vpack.c.b16 %v420, %v416
        %v453 = vpack.c.b16 %v421, %v417
        %486 = vmatprep.subr.bf16.mxu0 %v423
        %487 = vmatpush1.bf16.msra.mxu0 %v422
        %488 = vmatprep.subr.bf16.mxu0 %v427
        %489 = vmatpush1.bf16.msra.mxu0 %v426
        %490 = vmatprep.subr.bf16.mxu0 %v431
        %491 = vmatpush1.bf16.msra.mxu0 %v430
        %492 = vmatprep.subr.bf16.mxu0 %v435
        %493 = vmatpush1.bf16.msra.mxu0 %v434
        %494 = vmatprep.subr.bf16.mxu0 %v439
        %495 = vmatpush1.bf16.msra.mxu0 %v438
        %496 = vmatprep.subr.bf16.mxu0 %v443
        %497 = vmatpush1.bf16.msra.mxu0 %v442
        %498 = vmatprep.subr.bf16.mxu0 %v447
        %499 = vmatpush1.bf16.msra.mxu0 %v446
        %500 = vmatprep.subr.bf16.mxu0 %v451
        %501 = vmatpush1.bf16.msra.mxu0 %v450
        %502 = vmatprep.subr.bf16.mxu0 0
        %503 = vmatpush1.bf16.msra.mxu0 0
        %504 = vmatprep.subr.bf16.mxu0 0
        %505 = vmatpush1.bf16.msra.mxu0 0
        %506 = vmatprep.subr.bf16.mxu0 0
        %507 = vmatpush1.bf16.msra.mxu0 0
        %508 = vmatprep.subr.bf16.mxu0 0
        %509 = vmatpush1.bf16.msra.mxu0 0
        %510 = vmatprep.subr.bf16.mxu0 0
        %511 = vmatpush1.bf16.msra.mxu0 0
        %512 = vmatprep.subr.bf16.mxu0 0
        %513 = vmatpush1.bf16.msra.mxu0 0
        %514 = vmatprep.subr.bf16.mxu0 0
        %515 = vmatpush1.bf16.msra.mxu0 0
        %516 = vmatprep.subr.bf16.mxu0 0
        %517 = vmatpush1.bf16.msra.mxu0 0
        %518 = vmatprep.mubr.bf16.mxu0 0
        %519 = vmatmul.mubr.bf16.gmra.mrb[0].mxu0 %v271
        %v520 = vpop.f32.mrb[0].mxu0
        %v521 = vadd.f32 %v309, %v520
        %v522 = vpop.f32.mrb[0].mxu0
        %v523 = vadd.f32 %v313, %v522
        %v524 = vpop.f32.mrb[0].mxu0
        %v525 = vpop.f32.mrb[0].mxu0
        %526 = vdwg.mxu0
        %527 = vmatprep.subr.bf16.mxu0 %v425
        %528 = vmatpush1.bf16.msra.mxu0 %v424
        %529 = vmatprep.subr.bf16.mxu0 %v429
        %530 = vmatpush1.bf16.msra.mxu0 %v428
        %531 = vmatprep.subr.bf16.mxu0 %v433
        %532 = vmatpush1.bf16.msra.mxu0 %v432
        %533 = vmatprep.subr.bf16.mxu0 %v437
        %534 = vmatpush1.bf16.msra.mxu0 %v436
        %535 = vmatprep.subr.bf16.mxu0 %v441
        %536 = vmatpush1.bf16.msra.mxu0 %v440
        %537 = vmatprep.subr.bf16.mxu0 %v445
        %538 = vmatpush1.bf16.msra.mxu0 %v444
        %539 = vmatprep.subr.bf16.mxu0 %v449
        %540 = vmatpush1.bf16.msra.mxu0 %v448
        %541 = vmatprep.subr.bf16.mxu0 %v453
        %542 = vmatpush1.bf16.msra.mxu0 %v452
        %543 = vmatprep.subr.bf16.mxu0 0
        %544 = vmatpush1.bf16.msra.mxu0 0
        %545 = vmatprep.subr.bf16.mxu0 0
        %546 = vmatpush1.bf16.msra.mxu0 0
        %547 = vmatprep.subr.bf16.mxu0 0
        %548 = vmatpush1.bf16.msra.mxu0 0
        %549 = vmatprep.subr.bf16.mxu0 0
        %550 = vmatpush1.bf16.msra.mxu0 0
        %551 = vmatprep.subr.bf16.mxu0 0
        %552 = vmatpush1.bf16.msra.mxu0 0
        %553 = vmatprep.subr.bf16.mxu0 0
        %554 = vmatpush1.bf16.msra.mxu0 0
        %555 = vmatprep.subr.bf16.mxu0 0
        %556 = vmatpush1.bf16.msra.mxu0 0
        %557 = vmatprep.subr.bf16.mxu0 0
        %558 = vmatpush1.bf16.msra.mxu0 0
        %559 = vmatprep.mubr.bf16.mxu0 0
        %560 = vmatmul.mubr.bf16.gmra.mrb[0].mxu0 %v271
        %v561 = vpop.f32.mrb[0].mxu0
        %v562 = vadd.f32 %v317, %v561
        %v563 = vpop.f32.mrb[0].mxu0
        %v564 = vadd.f32 %v321, %v563
        %v565 = vpop.f32.mrb[0].mxu0
        %v566 = vpop.f32.mrb[0].mxu0
        %567 = vdwg.mxu0
        %v568 = vmul.f32 %v521, %v562
        %v569 = vmul.f32 %v523, %v564
        %v570 = vpack.c.bf16 %v568, %v568
        %v571 = vpack.c.bf16 %v569, %v569
        %v572 = vld [vmem:[#allocation7] sm:$0xf]
        %v573 = vld [vmem:[#allocation7 + $0x4] sm:$0xf]
        %v574 = vld [vmem:[#allocation7 + $0x8] sm:$0xf]
        %v575 = vld [vmem:[#allocation7 + $0xc] sm:$0xf]
        %v576 = vld [vmem:[#allocation7 + $0x10] sm:$0xf]
        %v577 = vld [vmem:[#allocation7 + $0x14] sm:$0xf]
        %v578 = vld [vmem:[#allocation7 + $0x18] sm:$0xf]
        %v579 = vld [vmem:[#allocation7 + $0x1c] sm:$0xf]
        %v580 = vld [vmem:[#allocation7 + $0x20] sm:$0xf]
        %v581 = vld [vmem:[#allocation7 + $0x24] sm:$0xf]
        %v582 = vld [vmem:[#allocation7 + $0x28] sm:$0xf]
        %v583 = vld [vmem:[#allocation7 + $0x2c] sm:$0xf]
        %v584 = vld [vmem:[#allocation7 + $0x30] sm:$0xf]
        %v585 = vld [vmem:[#allocation7 + $0x34] sm:$0xf]
        %v586 = vld [vmem:[#allocation7 + $0x38] sm:$0xf]
        %v587 = vld [vmem:[#allocation7 + $0x3c] sm:$0xf]
        %v588 = vld [vmem:[#allocation7 + $0x40] sm:$0xf]
        %v589 = vld [vmem:[#allocation7 + $0x44] sm:$0xf]
        %v590 = vld [vmem:[#allocation7 + $0x48] sm:$0xf]
        %v591 = vld [vmem:[#allocation7 + $0x4c] sm:$0xf]
        %v592 = vld [vmem:[#allocation7 + $0x50] sm:$0xf]
        %v593 = vld [vmem:[#allocation7 + $0x54] sm:$0xf]
        %v594 = vld [vmem:[#allocation7 + $0x58] sm:$0xf]
        %v595 = vld [vmem:[#allocation7 + $0x5c] sm:$0xf]
        %v596 = vld [vmem:[#allocation7 + $0x60] sm:$0xf]
        %v597 = vld [vmem:[#allocation7 + $0x64] sm:$0xf]
        %v598 = vld [vmem:[#allocation7 + $0x68] sm:$0xf]
        %v599 = vld [vmem:[#allocation7 + $0x6c] sm:$0xf]
        %v600 = vld [vmem:[#allocation7 + $0x70] sm:$0xf]
        %v601 = vld [vmem:[#allocation7 + $0x74] sm:$0xf]
        %v602 = vld [vmem:[#allocation7 + $0x78] sm:$0xf]
        %v603 = vld [vmem:[#allocation7 + $0x7c] sm:$0xf]
        %v604 = vld [vmem:[%s4] sm:$0x1]
        %v606 = vlaneseq
        %v607 = vshrl.u32 %v606, 7
        %v608 = vsub.s32 0, %v607
        %v609 = vrot.slane %v604, %v608
        %v643 = vunpack.c.l.b16 %v572
        %v644 = vunpack.c.l.b16 %v573
        %v645 = vunpack.c.l.b16 %v574
        %v646 = vunpack.c.l.b16 %v575
        %v647 = vunpack.c.l.b16 %v576
        %v648 = vunpack.c.l.b16 %v577
        %v649 = vunpack.c.l.b16 %v578
        %v650 = vunpack.c.l.b16 %v579
        %v651 = vunpack.c.l.b16 %v580
        %v652 = vunpack.c.l.b16 %v581
        %v653 = vunpack.c.l.b16 %v582
        %v654 = vunpack.c.l.b16 %v583
        %v655 = vunpack.c.l.b16 %v584
        %v656 = vunpack.c.l.b16 %v585
        %v657 = vunpack.c.l.b16 %v586
        %v658 = vunpack.c.l.b16 %v587
        %v659 = vunpack.c.l.b16 %v588
        %v660 = vunpack.c.l.b16 %v589
        %v661 = vunpack.c.l.b16 %v590
        %v662 = vunpack.c.l.b16 %v591
        %v663 = vunpack.c.l.b16 %v592
        %v664 = vunpack.c.l.b16 %v593
        %v665 = vunpack.c.l.b16 %v594
        %v666 = vunpack.c.l.b16 %v595
        %v667 = vunpack.c.l.b16 %v596
        %v668 = vunpack.c.l.b16 %v597
        %v669 = vunpack.c.l.b16 %v598
        %v670 = vunpack.c.l.b16 %v599
        %v671 = vunpack.c.l.b16 %v600
        %v672 = vunpack.c.l.b16 %v601
        %v673 = vunpack.c.l.b16 %v602
        %v674 = vunpack.c.l.b16 %v603
        %v675 = vpack.c.b16 %v644, %v643
        %v676 = vpack.c.b16 %v646, %v645
        %v677 = vpack.c.b16 %v648, %v647
        %v678 = vpack.c.b16 %v650, %v649
        %v679 = vpack.c.b16 %v652, %v651
        %v680 = vpack.c.b16 %v654, %v653
        %v681 = vpack.c.b16 %v656, %v655
        %v682 = vpack.c.b16 %v658, %v657
        %v683 = vpack.c.b16 %v660, %v659
        %v684 = vpack.c.b16 %v662, %v661
        %v685 = vpack.c.b16 %v664, %v663
        %v686 = vpack.c.b16 %v666, %v665
        %v687 = vpack.c.b16 %v668, %v667
        %v688 = vpack.c.b16 %v670, %v669
        %v689 = vpack.c.b16 %v672, %v671
        %v690 = vpack.c.b16 %v674, %v673
        %707 = vmatprep.subr.bf16.mxu0 0
        %708 = vmatpush1.bf16.msra.mxu0 %v675
        %709 = vmatprep.subr.bf16.mxu0 0
        %710 = vmatpush1.bf16.msra.mxu0 %v676
        %711 = vmatprep.subr.bf16.mxu0 0
        %712 = vmatpush1.bf16.msra.mxu0 %v677
        %713 = vmatprep.subr.bf16.mxu0 0
        %714 = vmatpush1.bf16.msra.mxu0 %v678
        %715 = vmatprep.subr.bf16.mxu0 0
        %716 = vmatpush1.bf16.msra.mxu0 %v679
        %717 = vmatprep.subr.bf16.mxu0 0
        %718 = vmatpush1.bf16.msra.mxu0 %v680
        %719 = vmatprep.subr.bf16.mxu0 0
        %720 = vmatpush1.bf16.msra.mxu0 %v681
        %721 = vmatprep.subr.bf16.mxu0 0
        %722 = vmatpush1.bf16.msra.mxu0 %v682
        %723 = vmatprep.subr.bf16.mxu0 0
        %724 = vmatpush1.bf16.msra.mxu0 %v683
        %725 = vmatprep.subr.bf16.mxu0 0
        %726 = vmatpush1.bf16.msra.mxu0 %v684
        %727 = vmatprep.subr.bf16.mxu0 0
        %728 = vmatpush1.bf16.msra.mxu0 %v685
        %729 = vmatprep.subr.bf16.mxu0 0
        %730 = vmatpush1.bf16.msra.mxu0 %v686
        %731 = vmatprep.subr.bf16.mxu0 0
        %732 = vmatpush1.bf16.msra.mxu0 %v687
        %733 = vmatprep.subr.bf16.mxu0 0
        %734 = vmatpush1.bf16.msra.mxu0 %v688
        %735 = vmatprep.subr.bf16.mxu0 0
        %736 = vmatpush1.bf16.msra.mxu0 %v689
        %737 = vmatprep.subr.bf16.mxu0 0
        %738 = vmatpush1.bf16.msra.mxu0 %v690
        %739 = vmatprep.mubr.bf16.mxu0 %v571
        %740 = vmatmul.mubr.bf16.gmra.mrb[0].mxu0 %v570
        %v741 = vpop.f32.mrb[0].mxu0
        %v742 = vadd.f32 %v609, %v741
        %v743 = vpop.f32.mrb[0].mxu0
        %v744 = vpop.f32.mrb[0].mxu0
        %v745 = vpop.f32.mrb[0].mxu0
        %746 = vdwg.mxu0
        %747 = vst [vmem:[%s268] sm:$0xff] %v742
        %s748 = sand.u32 %s141, 1
        %s749 = scalar_lea.sflag [#allocation4], %s748
        %s750 = sand.u32 %s141, 1
        %s751 = smul.addr %s750, 8
        %s752 = scalar_lea.vmem [#allocation8], %s751
        // Predicated region
        $region53: #{tpu_custom_call.1} parent=39 // pred_check
          %p753 = pneg %p151
        $region54: #{tpu_custom_call.1} parent=39 // pred_check_branch
          %755 = sbr.rel (%p753) target = $region56
        $region55: #{tpu_custom_call.1} parent=39 // pred_region
          %s757 = ssub.s32 128, 128
          %758 = vsyncadd %s749, %s757
          %s759 = smul.addr %s23, 128
          %s760 = scalar_lea.hbm %s5, %s759
          %s762 = sshll.u32 %s752, 4
          %s763 = int_to_ptr.vmem [resolvable:$true] %s762
          %765 = dma.vmem_to_hbm [thread:$0]  %s763, 128, %s760, %s749
        $region56: #{tpu_custom_call.1} parent=39 // pred_fallthru
          _
      $region40: #{tpu_custom_call.1} parent=5 // pred_fallthru
        _
      %p766 = scmp.le.s32.totalorder 2, %s18
      // Predicated region
      $region57: #{tpu_custom_call.1} parent=5 // pred_check
        %p767 = pneg %p766
      $region58: #{tpu_custom_call.1} parent=5 // pred_check_branch
        %769 = sbr.rel (%p767) target = $region60
      $region59: #{tpu_custom_call.1} parent=5 // pred_region
        %s770 = ssub.s32 %s18, 2
        // Predicated region
        $region61: #{tpu_custom_call.1} parent=59 // pred_check
          %p771 = pneg %p157
        $region62: #{tpu_custom_call.1} parent=59 // pred_check_branch
          %773 = sbr.rel (%p771) target = $region64
        $region63: #{tpu_custom_call.1} parent=59 // pred_region
          %s774 = sand.u32 %s142, 1
          %s775 = scalar_lea.sflag [#allocation4], %s774
          %s776 = sand.u32 %s142, 1
          %s777 = smul.addr %s776, 8
          %s778 = scalar_lea.vmem [#allocation8], %s777
          %779 = dma.done %s775, 128
        $region64: #{tpu_custom_call.1} parent=59 // pred_fallthru
          _
      $region60: #{tpu_custom_call.1} parent=5 // pred_fallthru
        _
    $region6: #{tpu_custom_call.1} parent=1 // loop_footer
      %s22 = sadd.s32 1, %s18
    $region7: #{tpu_custom_call.1} parent=1 // loop_footer_branch
      %17 = sbr.rel target = $region3
    $region8: #{tpu_custom_call.1} parent=1 // loop_exit
      _
    %780 = vsyncpa [#allocation3], 1
    %s781 = scalar_lea.sflag [#allocation3], 1
    %782 = vsyncpa %s781, 1
    %783 = vsyncpa [#allocation6], 1
    %784 = vsyncpa [#allocation4], 1
    %s785 = scalar_lea.sflag [#allocation4], 1
    %786 = vsyncpa %s785, 1

</llo_original>
